<compile_context>
chip_gen: v7x
topology: tpu7x:2x2x1
jax: 0.10.0
libtpu: 0.0.40
codegen_flags: <defaults>
</compile_context>

<pallas_src>
from collections import namedtuple

import jax
import jax.numpy as jnp
from jax import lax
from jax.experimental import pallas as pl
from jax.experimental.pallas import tpu as pltpu

graph_result = namedtuple(
    "graph_result",
    ["logits", "loss", "last_hidden_state", "cluster_size", "cluster_ratio"],
)


def _one_hot_kernel(t_ref, o_ref):
    # t_ref: (TILE_N, 1) int32 in VMEM; o_ref: (TILE_N, TILE_C) float32 in VMEM.
    tn, tc = o_ref.shape
    # Shift the ids by this class tile's base column (a (TILE_N, 1) op) rather
    # than offsetting the big iota: the iota below is loop-invariant across the
    # grid and hoistable, and we drop one full-tile VPU add per step.
    t_rel = t_ref[...] - pl.program_id(1) * tc
    col_ids = lax.broadcasted_iota(jnp.int32, (tn, tc), dimension=1)
    # Broadcast compare (TILE_N,1) vs (TILE_N,TILE_C); cheap VPU work hidden
    # under the output writeback DMA.
    o_ref[...] = (t_rel == col_ids).astype(jnp.float32)


def one_hot_pallas(t_flat: jax.Array, num_classes: int,
                   *, tile_n: int = 512, tile_c: int = 4096) -> jax.Array:
    """t_flat: (N,) integer ids -> (N, num_classes) float32 one-hot.

    tile_n must be a multiple of 8, tile_c a multiple of 128 (defaults are).
    Output shape is exact — no padding, no post-slice.
    """
    n = int(t_flat.shape[0])
    c = int(num_classes)

    # If a dim fits in one tile, the block spans the full dim (always a legal
    # block shape even when not 8/128-aligned).  Otherwise use the aligned
    # tile and let pl.cdiv produce an edge block at the boundary; only that
    # one tile takes masked tail stores.
    tn = n if n <= tile_n else tile_n
    tc = c if c <= tile_c else tile_c

    grid = (pl.cdiv(n, tn), pl.cdiv(c, tc))  # N outer, C inner: id tile reused

    t2d = t_flat.astype(jnp.int32).reshape(n, 1)

    # VMEM budget: double-buffered output blocks + id blocks (lane-padded to
    # 128) + headroom.  Raise the scoped limit so the 8 MiB default tiles also
    # fit on v5e (16 MiB scoped default); clamp under v7x's 64 MiB physical.
    out_block_bytes = tn * tc * 4
    in_block_bytes = tn * 128 * 4
    vmem_limit = min(max(2 * (out_block_bytes + in_block_bytes) + (4 << 20),
                         32 << 20), 48 << 20)

    return pl.pallas_call(
        _one_hot_kernel,
        out_shape=jax.ShapeDtypeStruct((n, c), jnp.float32),
        grid=grid,
        in_specs=[
            # (TILE_N, 1): same id tile for every class tile j (no re-DMA).
            pl.BlockSpec((tn, 1), lambda i, j: (i, 0)),
        ],
        out_specs=pl.BlockSpec((tn, tc), lambda i, j: (i, j)),
        compiler_params=pltpu.CompilerParams(
            dimension_semantics=("parallel", "parallel"),
            vmem_limit_bytes=vmem_limit,
        ),
        cost_estimate=pl.CostEstimate(
            flops=n * c,
            transcendentals=0,
            bytes_accessed=4 * n * c + 4 * n,
        ),
    )(t2d)


class TestOracle:
    """JAX/Pallas port of the PyTorch TestOracle module."""

    def __init__(self, tokenizer=None):
        self.tokenizer = tokenizer  # unused, kept for interface parity

    def forward(self, t: jax.Array, num_classes: int | None = None) -> graph_result:
        if num_classes is None:
            # F.one_hot infers C = t.max() + 1 from the data.  This is a
            # device->host sync and forces a recompile per distinct C; pass
            # num_classes explicitly for repeated calls with a known vocab.
            num_classes = int(jax.device_get(jnp.max(t))) + 1
        b, s = t.shape
        # (N, C) -> (B, S, C) reshape of a contiguous array is metadata-only.
        logits = one_hot_pallas(t.reshape(-1), num_classes).reshape(b, s, num_classes)
        # NOTE: the original PyTorch forward omits last_hidden_state (which
        # would actually raise a TypeError there); fill with None for a valid tuple.
        # TODO(synk): PyTorch F.one_hot raises on negative / out-of-range ids;
        # this kernel silently emits an all-zero row instead (matches
        # jax.nn.one_hot) — out-of-range columns are never written since the
        # output has exactly num_classes columns.
        return graph_result(
            logits=logits,
            loss=None,
            last_hidden_state=None,
            cluster_size=None,
            cluster_ratio=None,
        )

    __call__ = forward


if __name__ == "__main__":
    key = jax.random.PRNGKey(0)
    B, S, VOCAB = 2, 8, 13  # small token-id tensor, ids in [0, VOCAB)
    t = jax.random.randint(key, (B, S), 0, VOCAB, dtype=jnp.int32)

    oracle = TestOracle(tokenizer=None)

    # 1) Data-dependent num_classes (matches F.one_hot default behavior).
    result = oracle(t)
    logits = jax.block_until_ready(result.logits)
    num_classes = int(jax.device_get(jnp.max(t))) + 1
    ref = jax.nn.one_hot(t, num_classes, dtype=jnp.float32)
    assert logits.shape == ref.shape, (logits.shape, ref.shape)
    assert logits.dtype == jnp.float32
    assert bool(jnp.all(logits == ref))

    # 2) Explicit num_classes (avoids per-call host sync / recompile).
    result2 = oracle(t, num_classes=VOCAB)
    logits2 = jax.block_until_ready(result2.logits)
    ref2 = jax.nn.one_hot(t, VOCAB, dtype=jnp.float32)
    assert logits2.shape == ref2.shape
    assert bool(jnp.all(logits2 == ref2))

    # 3) Tiny-tile direct call exercising edge blocks on both axes
    #    (n=20 with tile_n=8 -> partial row tile; C=300 with tile_c=128 ->
    #     partial class tile), same path real vocabs take at scale.
    t3 = jax.random.randint(jax.random.PRNGKey(1), (20,), 0, 300, dtype=jnp.int32)
    oh3 = jax.block_until_ready(one_hot_pallas(t3, 300, tile_n=8, tile_c=128))
    ref3 = jax.nn.one_hot(t3, 300, dtype=jnp.float32)
    assert oh3.shape == ref3.shape
    assert bool(jnp.all(oh3 == ref3))

    print("KERNEL_OK")
</pallas_src>

<mosaic_0001>
module attributes {stable_mosaic.version = 11 : i64} {
  func.func @_one_hot_kernel(%arg0: i32, %arg1: i32, %arg2: memref<16x1xi32, #tpu.memory_space<vmem>>, %arg3: memref<16x13xf32, #tpu.memory_space<vmem>>) attributes {dimension_semantics = [#tpu.dimension_semantics<parallel>, #tpu.dimension_semantics<parallel>], iteration_bounds = array<i64: 1, 1>, scalar_prefetch = 0 : i64, scratch_operands = 0 : i64, tpu.core_type = #tpu.core_type<tc>, window_params = [{transform_indices = @transform_0, window_bounds = array<i64: 16, 1>}, {transform_indices = @transform_1, window_bounds = array<i64: 16, 13>}]} {
    %c0 = arith.constant 0 : index
    %c0_0 = arith.constant 0 : index
    %0 = vector.load %arg2[%c0, %c0_0] : memref<16x1xi32, #tpu.memory_space<vmem>>, vector<16x1xi32>
    %c13_i32 = arith.constant 13 : i32
    %1 = arith.muli %arg1, %c13_i32 : i32
    %2 = vector.broadcast %1 : i32 to vector<16x1xi32>
    %3 = arith.subi %0, %2 : vector<16x1xi32>
    %4 = tpu.iota {dimensions = array<i32: 1>} : vector<16x13xi32>
    %5 = vector.broadcast %3 : vector<16x1xi32> to vector<16x13xi32>
    %6 = arith.cmpi eq, %5, %4 : vector<16x13xi32>
    %7 = arith.extui %6 : vector<16x13xi1> to vector<16x13xi32>
    %8 = arith.sitofp %7 : vector<16x13xi32> to vector<16x13xf32>
    %c0_1 = arith.constant 0 : index
    %c0_2 = arith.constant 0 : index
    %9 = vector.load %arg3[%c0_1, %c0_2] : memref<16x13xf32, #tpu.memory_space<vmem>>, vector<16x13xf32>
    tpu.vector_store %arg3[%c0_1, %c0_2], %8 {strides = array<i32>} : memref<16x13xf32, #tpu.memory_space<vmem>>, vector<16x13xf32>,
    return
  }
  func.func @transform_0(%arg0: i32, %arg1: i32) -> (i32, i32) {
    %c0_i32 = arith.constant 0 : i32
    %c0_i32_0 = arith.constant 0 : i32
    return %arg0, %c0_i32 : i32, i32
  }
  func.func @transform_1(%arg0: i32, %arg1: i32) -> (i32, i32) {
    %c0_i32 = arith.constant 0 : i32
    return %arg0, %arg1 : i32, i32
  }
}

</mosaic_0001>

<llo_original>
// kernel: tpu_custom_call.1
$region0: #{tpu_custom_call.1}
  #allocation0 [shape = 'u32[]', space=smem, size = 0x4, offset = 0x4, fixed_abs, tag = 'smem constant byte address 0x4 - core index']
  #allocation1 [shape = 'u32[144,128]{1,0:T(1,128)}', space=vmem, size = 0x12000, scoped, tag = 'internal scratch']
  %s0 = inlined_call_operand.vmem [shape: s32[16,1], index: 0, kind: input, shape index: {}]
  %s1 = inlined_call_operand.hbm [shape: f32[16,13], index: 1, kind: output, shape index: {}]
  %s2 = sld [smem:[#allocation0]]
  $region14: #{tpu_custom_call.1} parent=0
    _
  %s4 = ssub.s32 1, %s2
  %s5 = scalar_select 0, %s4, %s2
  $region1: #{tpu_custom_call.1} parent=0
    #allocation2 [shape = 'u8[8192]{0}', space=vmem, size = 0x2000, scoped, tag = 'output window, operand 0, single buffered']
    #allocation3 [shape = 's32[1]{0}', space=sflag, size = 0x4, scoped, tag = 'scoped memory for tpu_custom_call.1']
    %6 = vsyncpa [#allocation3], 0
    // Predicated region
    $region2: #{tpu_custom_call.1} parent=1 // pred_check
      _
    $region3: #{tpu_custom_call.1} parent=1 // pred_check_branch
      %8 = sbr.rel (0) target = $region5
    $region4: #{tpu_custom_call.1} parent=1 // pred_region
      _
    $region5: #{tpu_custom_call.1} parent=1 // pred_fallthru
      _
    %v9 = vld [vmem:[%s0] sm:$0xff]
    %v10 = vld [vmem:[%s0 + $0x8] sm:$0xff]
    %s11 = smul.u32 0, 13
    %v12 = vstv %s11
    %v13 = vsub.s32 %v9, %v12
    %v14 = vsub.s32 %v10, %v12
    %v15 = vlaneseq
    %v16 = vand.u32 %v15, 127
    %17 = vset.pattern.permute.xlu0 0
    %18 = vperm.xlu0 %17, %v13
    %v19 = vpop.permute.xlu0 %18
    %20 = vset.pattern.permute.xlu0 0
    %21 = vperm.xlu0 %20, %v14
    %v22 = vpop.permute.xlu0 %21
    %vm23 = vcmp.eq.s32.totalorder %v19, %v16
    %vm24 = vcmp.eq.s32.totalorder %v22, %v16
    %v25 = vsel %vm23, 1, 0
    %v26 = vsel %vm24, 1, 0
    %v27 = vcvt.s32.f32 %v25
    %v28 = vcvt.s32.f32 %v26
    %vm29 = vcmask 105472
    %30 = vst.msk [vmem:[#allocation2] sm:$0xff] %vm29, %v27
    %31 = vst.msk [vmem:[#allocation2 + $0x8] sm:$0xff] %vm29, %v28
    // Predicated region
    $region6: #{tpu_custom_call.1} parent=1 // pred_check
      _
    $region7: #{tpu_custom_call.1} parent=1 // pred_check_branch
      %33 = sbr.rel (0) target = $region9
    $region8: #{tpu_custom_call.1} parent=1 // pred_region
      %s35 = ssub.s32 256, 256
      %36 = vsyncadd [#allocation3], %s35
      %s37 = sshll.u32 [#allocation2], 4
      %s38 = int_to_ptr.vmem [resolvable:$true] %s37
      %43 = dma.vmem_to_hbm [thread:$0]  %s38, 256, %s1, [#allocation3], 128, 128, 8
    $region9: #{tpu_custom_call.1} parent=1 // pred_fallthru
      _
    // Predicated region
    $region10: #{tpu_custom_call.1} parent=1 // pred_check
      _
    $region11: #{tpu_custom_call.1} parent=1 // pred_check_branch
      %45 = sbr.rel (0) target = $region13
    $region12: #{tpu_custom_call.1} parent=1 // pred_region
      %46 = dma.done [#allocation3], 256
    $region13: #{tpu_custom_call.1} parent=1 // pred_fallthru
      _
    %47 = vsyncpa [#allocation3], 1

</llo_original>
